<compile_context>
chip_gen: v7x
topology: tpu7x:2x2x1
jax: 0.10.0
libtpu: 0.0.40
codegen_flags: <defaults>
</compile_context>

<pallas_src>
import numpy as np
import jax
import jax.numpy as jnp
from jax.experimental import pallas as pl
from jax.experimental.pallas import tpu as pltpu

_LN_EPS = 1e-5  # PyTorch nn.LayerNorm default


def _patch_merging_kernel(x_ref, w_ref, b_ref, o_ref):
    # x_ref block: (bb, H2, 2, W2, 2C)  -- dim 2 is the input-row parity r.
    bb, H2, _, W2, C2 = x_ref.shape
    R = H2 * W2
    n_feat = 2 * C2  # = 4C, the LayerNorm feature width

    # Even input rows -> channels [x0 | x2]; odd input rows -> channels [x1 | x3].
    # Slice the ref directly (no full-block materialization).
    xe = x_ref[:, :, 0, :, :].reshape(bb * R, C2).astype(jnp.float32)
    xo = x_ref[:, :, 1, :, :].reshape(bb * R, C2).astype(jnp.float32)

    # LayerNorm statistics over the full 4C (split across the two halves).
    inv_n = 1.0 / n_feat
    mu = (jnp.sum(xe, axis=-1, keepdims=True)
          + jnp.sum(xo, axis=-1, keepdims=True)) * inv_n
    ce = xe - mu
    co = xo - mu
    var = (jnp.sum(ce * ce, axis=-1, keepdims=True)
           + jnp.sum(co * co, axis=-1, keepdims=True)) * inv_n
    inv_std = jax.lax.rsqrt(var + _LN_EPS)

    # gamma/beta are folded into w_ref / b_ref host-side, so only the plain
    # normalization remains before the single fat K = 4C matmul.
    y = (jnp.concatenate([ce, co], axis=-1) * inv_std).astype(w_ref.dtype)  # (N, 4C)
    out = jnp.dot(y, w_ref[...], preferred_element_type=jnp.float32) + b_ref[...]
    o_ref[...] = out.reshape(bb, R, -1).astype(o_ref.dtype)


def patch_merging_forward(x, params, *, feature_size, weight_dtype=jnp.bfloat16):
    """x: (B, H*W, C) with H = W = 2*feature_size.  Returns (B, (H/2)*(W/2), OC)."""
    B, L, C = x.shape
    H = W = 2 * feature_size
    assert L == H * W, "input feature has wrong size"
    H2 = W2 = feature_size
    R = H2 * W2
    C2 = 2 * C

    gamma = params["gamma"].astype(jnp.float32)   # (4C,)
    beta = params["beta"].astype(jnp.float32)     # (4C,)
    w = params["w"].astype(jnp.float32)           # (4C, OC)  (y = x4 @ w)
    OC = w.shape[1]

    # Free reshape (no data movement): (B, H*W, C) -> (B, H2, 2, W2, 2C);
    # x5[b, i, r, j, s*C + c] == x[b, 2i+r, 2j+s, c].
    x5 = x.reshape(B, H2, 2, W2, C2)

    # Kernel channel order is [x0 | x2 | x1 | x3]; PyTorch order is [x0 | x1 | x2 | x3].
    # Fold gamma into the (row-permuted) weight in f32, and beta into a bias.
    perm = np.concatenate([np.arange(0, C), np.arange(2 * C, 3 * C),     # even rows
                           np.arange(C, 2 * C), np.arange(3 * C, 4 * C)])  # odd rows
    w_fold = (gamma[:, None] * w)[perm].astype(weight_dtype)   # (4C, OC)
    bias = (beta @ w).reshape(1, OC)                            # (1, OC) f32

    # Grid selection: one fat step by default; tile the batch only when the block
    # would exceed a conservative per-buffer VMEM budget (double-buffered blocks +
    # weights must stay well under v7x's 64 MiB).  A 2-way "parallel" split is only
    # worth it on dual-TC chips when per-core work is substantial.
    itemsize = x.dtype.itemsize
    per_batch_bytes = R * 4 * C * itemsize + R * OC * itemsize
    budget = 12 << 20
    nb = B  # fallback: one batch per step
    for cand in range(1, B + 1):
        if B % cand == 0 and (B // cand) * per_batch_bytes <= budget:
            nb = cand
            break
    if nb == 1 and B % 2 == 0 and B * R >= 8192:
        nb = 2  # enough rows per core to amortize the extra step on dual-TC chips
    bb = B // nb

    flops = int(2 * B * R * (4 * C) * OC + 10 * B * R * 4 * C + B * R * OC)
    bytes_accessed = int(
        x5.size * itemsize
        + 4 * C * OC * np.dtype(weight_dtype).itemsize
        + OC * 4
        + B * R * OC * itemsize)

    return pl.pallas_call(
        _patch_merging_kernel,
        out_shape=jax.ShapeDtypeStruct((B, R, OC), x.dtype),
        grid=(nb,),
        in_specs=[
            pl.BlockSpec((bb, H2, 2, W2, C2), lambda i: (i, 0, 0, 0, 0)),  # x
            pl.BlockSpec((2 * C2, OC), lambda i: (0, 0)),                  # gamma-folded W
            pl.BlockSpec((1, OC), lambda i: (0, 0)),                       # beta @ W bias
        ],
        out_specs=pl.BlockSpec((bb, R, OC), lambda i: (i, 0, 0)),
        compiler_params=pltpu.CompilerParams(
            dimension_semantics=("parallel",),
            vmem_limit_bytes=32 * 1024 * 1024),
        cost_estimate=pl.CostEstimate(flops=flops, transcendentals=int(B * R),
                                      bytes_accessed=bytes_accessed),
    )(x5, w_fold, bias)


# ---------------- pure-JAX reference (mirrors the PyTorch forward) ----------------

def _reference(x, params, *, feature_size, eps=_LN_EPS):
    B, L, C = x.shape
    H = W = 2 * feature_size
    xr = x.reshape(B, H, W, C)
    x0 = xr[:, 0::2, 0::2, :]
    x1 = xr[:, 1::2, 0::2, :]
    x2 = xr[:, 0::2, 1::2, :]
    x3 = xr[:, 1::2, 1::2, :]
    xc = jnp.concatenate([x0, x1, x2, x3], axis=-1).reshape(B, -1, 4 * C)
    mu = xc.mean(-1, keepdims=True)
    var = jnp.mean((xc - mu) ** 2, axis=-1, keepdims=True)
    xn = (xc - mu) * jax.lax.rsqrt(var + eps) * params["gamma"] + params["beta"]
    return xn @ params["w"]


if __name__ == "__main__":
    # Small shapes consistent with the module: dim=64 -> 4C=256, feature_size=8
    # (H=W=16, L=256), out_channel=256, batch=2.
    B = 2
    dim = 64
    feature_size = 8
    out_channel = 256
    H = W = 2 * feature_size

    key = jax.random.PRNGKey(0)
    ks = jax.random.split(key, 4)
    x = jax.random.normal(ks[0], (B, H * W, dim), jnp.float32)
    params = {
        "gamma": 1.0 + 0.1 * jax.random.normal(ks[1], (4 * dim,), jnp.float32),
        "beta": 0.1 * jax.random.normal(ks[2], (4 * dim,), jnp.float32),
        "w": 0.05 * jax.random.normal(ks[3], (4 * dim, out_channel), jnp.float32),
    }

    out = patch_merging_forward(x, params, feature_size=feature_size)
    out = jax.block_until_ready(out)

    ref = _reference(x, params, feature_size=feature_size)
    assert out.shape == (B, feature_size * feature_size, out_channel)
    # Tolerance accounts for bf16 weight/activation ingest with f32 accumulation.
    if not jnp.allclose(out, ref, atol=3e-2, rtol=3e-2):
        err = float(jnp.max(jnp.abs(out - ref)))
        raise AssertionError(f"Pallas kernel output mismatch vs JAX reference (max abs err={err})")
    print("KERNEL_OK")
</pallas_src>

<mosaic_0001>
module attributes {stable_mosaic.version = 11 : i64} {
  func.func @_patch_merging_kernel(%arg0: i32, %arg1: memref<2x8x2x8x128xf32, #tpu.memory_space<vmem>>, %arg2: memref<256x256xbf16, #tpu.memory_space<vmem>>, %arg3: memref<1x256xf32, #tpu.memory_space<vmem>>, %arg4: memref<2x64x256xf32, #tpu.memory_space<vmem>>) attributes {dimension_semantics = [#tpu.dimension_semantics<parallel>], iteration_bounds = array<i64: 1>, scalar_prefetch = 0 : i64, scratch_operands = 0 : i64, tpu.core_type = #tpu.core_type<tc>, window_params = [{transform_indices = @transform_0, window_bounds = array<i64: 2, 8, 2, 8, 128>}, {pipeline_mode = #tpu.pipeline_mode<synchronous>, transform_indices = @transform_1, window_bounds = array<i64: 256, 256>}, {pipeline_mode = #tpu.pipeline_mode<synchronous>, transform_indices = @transform_2, window_bounds = array<i64: 1, 256>}, {transform_indices = @transform_3, window_bounds = array<i64: 2, 64, 256>}]} {
    %c0 = arith.constant 0 : index
    %c0_0 = arith.constant 0 : index
    %c0_1 = arith.constant 0 : index
    %c0_2 = arith.constant 0 : index
    %c0_3 = arith.constant 0 : index
    %0 = vector.load %arg1[%c0, %c0_0, %c0_1, %c0_2, %c0_3] : memref<2x8x2x8x128xf32, #tpu.memory_space<vmem>>, vector<2x8x1x8x128xf32>
    %1 = vector.shape_cast %0 : vector<2x8x1x8x128xf32> to vector<2x8x8x128xf32>
    %2 = vector.shape_cast %1 : vector<2x8x8x128xf32> to vector<128x128xf32>
    %c0_4 = arith.constant 0 : index
    %c0_5 = arith.constant 0 : index
    %c1 = arith.constant 1 : index
    %c0_6 = arith.constant 0 : index
    %c0_7 = arith.constant 0 : index
    %3 = vector.load %arg1[%c0_4, %c0_5, %c1, %c0_6, %c0_7] : memref<2x8x2x8x128xf32, #tpu.memory_space<vmem>>, vector<2x8x1x8x128xf32>
    %4 = vector.shape_cast %3 : vector<2x8x1x8x128xf32> to vector<2x8x8x128xf32>
    %5 = vector.shape_cast %4 : vector<2x8x8x128xf32> to vector<128x128xf32>
    %cst = arith.constant dense<0.000000e+00> : vector<128xf32>
    %6 = vector.multi_reduction <add>, %2, %cst [1] : vector<128x128xf32> to vector<128xf32>
    %7 = vector.shape_cast %6 : vector<128xf32> to vector<128x1xf32>
    %cst_8 = arith.constant dense<0.000000e+00> : vector<128xf32>
    %8 = vector.multi_reduction <add>, %5, %cst_8 [1] : vector<128x128xf32> to vector<128xf32>
    %9 = vector.shape_cast %8 : vector<128xf32> to vector<128x1xf32>
    %10 = arith.addf %7, %9 : vector<128x1xf32>
    %cst_9 = arith.constant 3.906250e-03 : f32
    %11 = vector.broadcast %cst_9 : f32 to vector<128x1xf32>
    %12 = arith.mulf %10, %11 : vector<128x1xf32>
    %13 = vector.broadcast %12 : vector<128x1xf32> to vector<128x128xf32>
    %14 = arith.subf %2, %13 : vector<128x128xf32>
    %15 = vector.broadcast %12 : vector<128x1xf32> to vector<128x128xf32>
    %16 = arith.subf %5, %15 : vector<128x128xf32>
    %17 = arith.mulf %14, %14 : vector<128x128xf32>
    %cst_10 = arith.constant dense<0.000000e+00> : vector<128xf32>
    %18 = vector.multi_reduction <add>, %17, %cst_10 [1] : vector<128x128xf32> to vector<128xf32>
    %19 = vector.shape_cast %18 : vector<128xf32> to vector<128x1xf32>
    %20 = arith.mulf %16, %16 : vector<128x128xf32>
    %cst_11 = arith.constant dense<0.000000e+00> : vector<128xf32>
    %21 = vector.multi_reduction <add>, %20, %cst_11 [1] : vector<128x128xf32> to vector<128xf32>
    %22 = vector.shape_cast %21 : vector<128xf32> to vector<128x1xf32>
    %23 = arith.addf %19, %22 : vector<128x1xf32>
    %cst_12 = arith.constant 3.906250e-03 : f32
    %24 = vector.broadcast %cst_12 : f32 to vector<128x1xf32>
    %25 = arith.mulf %23, %24 : vector<128x1xf32>
    %cst_13 = arith.constant 9.99999974E-6 : f32
    %26 = vector.broadcast %cst_13 : f32 to vector<128x1xf32>
    %27 = arith.addf %25, %26 : vector<128x1xf32>
    %28 = math.rsqrt %27 : vector<128x1xf32>
    %29 = tpu.concatenate %14, %16 in 1 : vector<128x128xf32>, vector<128x128xf32> -> vector<128x256xf32>
    %30 = vector.broadcast %28 : vector<128x1xf32> to vector<128x256xf32>
    %31 = arith.mulf %29, %30 : vector<128x256xf32>
    %32 = arith.truncf %31 : vector<128x256xf32> to vector<128x256xbf16>
    %c0_14 = arith.constant 0 : index
    %c0_15 = arith.constant 0 : index
    %33 = vector.load %arg2[%c0_14, %c0_15] : memref<256x256xbf16, #tpu.memory_space<vmem>>, vector<256x256xbf16>
    %cst_16 = arith.constant dense<0.000000e+00> : vector<128x256xf32>
    %34 = tpu.matmul %32, %33, %cst_16 {dimension_numbers = #tpu.dot_dimension_numbers<[1], [0], [0], [1], [0, 0, 1, 1], [], []>} : vector<128x256xbf16>, vector<256x256xbf16>, vector<128x256xf32> -> vector<128x256xf32>
    %c0_17 = arith.constant 0 : index
    %c0_18 = arith.constant 0 : index
    %35 = vector.load %arg3[%c0_17, %c0_18] : memref<1x256xf32, #tpu.memory_space<vmem>>, vector<1x256xf32>
    %36 = vector.broadcast %35 : vector<1x256xf32> to vector<128x256xf32>
    %37 = arith.addf %34, %36 : vector<128x256xf32>
    %38 = vector.shape_cast %37 : vector<128x256xf32> to vector<2x64x256xf32>
    %c0_19 = arith.constant 0 : index
    %c0_20 = arith.constant 0 : index
    %c0_21 = arith.constant 0 : index
    %39 = vector.load %arg4[%c0_19, %c0_20, %c0_21] : memref<2x64x256xf32, #tpu.memory_space<vmem>>, vector<2x64x256xf32>
    tpu.vector_store %arg4[%c0_19, %c0_20, %c0_21], %38 {strides = array<i32>} : memref<2x64x256xf32, #tpu.memory_space<vmem>>, vector<2x64x256xf32>,
    return
  }
  func.func @transform_0(%arg0: i32) -> (i32, i32, i32, i32, i32) {
    %c0_i32 = arith.constant 0 : i32
    %c0_i32_0 = arith.constant 0 : i32
    %c0_i32_1 = arith.constant 0 : i32
    %c0_i32_2 = arith.constant 0 : i32
    %c0_i32_3 = arith.constant 0 : i32
    return %arg0, %c0_i32, %c0_i32_0, %c0_i32_1, %c0_i32_2 : i32, i32, i32, i32, i32
  }
  func.func @transform_1(%arg0: i32) -> (i32, i32) {
    %c0_i32 = arith.constant 0 : i32
    %c0_i32_0 = arith.constant 0 : i32
    %c0_i32_1 = arith.constant 0 : i32
    return %c0_i32, %c0_i32_0 : i32, i32
  }
  func.func @transform_2(%arg0: i32) -> (i32, i32) {
    %c0_i32 = arith.constant 0 : i32
    %c0_i32_0 = arith.constant 0 : i32
    %c0_i32_1 = arith.constant 0 : i32
    return %c0_i32, %c0_i32_0 : i32, i32
  }
  func.func @transform_3(%arg0: i32) -> (i32, i32, i32) {
    %c0_i32 = arith.constant 0 : i32
    %c0_i32_0 = arith.constant 0 : i32
    %c0_i32_1 = arith.constant 0 : i32
    return %arg0, %c0_i32, %c0_i32_0 : i32, i32, i32
  }
}

</mosaic_0001>

<llo_original>
// kernel: tpu_custom_call.1
$region0: #{tpu_custom_call.1}
  #allocation0 [shape = 'u32[]', space=smem, size = 0x4, offset = 0x4, fixed_abs, tag = 'smem constant byte address 0x4 - core index']
  #allocation1 [shape = 'u32[144,128]{1,0:T(1,128)}', space=vmem, size = 0x12000, scoped, tag = 'internal scratch']
  %s0 = inlined_call_operand.hbm [shape: f32[2,8,2,8,128], index: 0, kind: input, shape index: {}]
  %s1 = inlined_call_operand.hbm [shape: bf16[256,256], index: 1, kind: input, shape index: {}]
  %s2 = inlined_call_operand.vmem [shape: f32[1,256], index: 2, kind: input, shape index: {}]
  %s3 = inlined_call_operand.hbm [shape: f32[2,64,256], index: 3, kind: output, shape index: {}]
  %s4 = sld [smem:[#allocation0]]
  $region30: #{tpu_custom_call.1} parent=0
    _
  %s6 = ssub.s32 1, %s4
  %s7 = scalar_select 0, %s6, %s4
  $region1: #{tpu_custom_call.1} parent=0
    #allocation2 [shape = 'u8[131072]{0}', space=vmem, size = 0x20000, scoped, tag = 'input window, operand 0, single buffered']
    #allocation3 [shape = 's32[1]{0}', space=sflag, size = 0x4, scoped, tag = 'scoped memory for tpu_custom_call.1']
    #allocation4 [shape = 's32[1]{0}', space=sflag, size = 0x4, scoped, tag = 'scoped memory for tpu_custom_call.1']
    #allocation5 [shape = 'u8[131072]{0}', space=vmem, size = 0x20000, scoped, tag = 'input window, operand 1, single buffered']
    #allocation6 [shape = 's32[1]{0}', space=sflag, size = 0x4, scoped, tag = 'scoped memory for tpu_custom_call.1']
    #allocation7 [shape = 'u8[131072]{0}', space=vmem, size = 0x20000, scoped, tag = 'output window, operand 0, single buffered']
    %8 = vsyncpa [#allocation3], 0
    %9 = vsyncpa [#allocation6], 0
    %10 = vsyncpa [#allocation4], 0
    // Predicated region
    $region2: #{tpu_custom_call.1} parent=1 // pred_check
      _
    $region3: #{tpu_custom_call.1} parent=1 // pred_check_branch
      %12 = sbr.rel (0) target = $region5
    $region4: #{tpu_custom_call.1} parent=1 // pred_region
      %s14 = ssub.s32 4096, 4096
      %15 = vsyncadd [#allocation3], %s14
      %s16 = sshll.u32 [#allocation2], 4
      %s17 = int_to_ptr.vmem [resolvable:$true] %s16
      %22 = dma.hbm_to_vmem [thread:$0]  %s0, 4096, %s17, [#allocation3], 128, 128, 8
    $region5: #{tpu_custom_call.1} parent=1 // pred_fallthru
      _
    // Predicated region
    $region6: #{tpu_custom_call.1} parent=1 // pred_check
      _
    $region7: #{tpu_custom_call.1} parent=1 // pred_check_branch
      %24 = sbr.rel (0) target = $region9
    $region8: #{tpu_custom_call.1} parent=1 // pred_region
      %s26 = ssub.s32 4096, 4096
      %27 = vsyncadd [#allocation6], %s26
      %s28 = sshll.u32 [#allocation5], 4
      %s29 = int_to_ptr.vmem [resolvable:$true] %s28
      %34 = dma.hbm_to_vmem [thread:$0]  %s1, 4096, %s29, [#allocation6], 128, 128, 8
    $region9: #{tpu_custom_call.1} parent=1 // pred_fallthru
      _
    // Predicated region
    $region10: #{tpu_custom_call.1} parent=1 // pred_check
      _
    $region11: #{tpu_custom_call.1} parent=1 // pred_check_branch
      %36 = sbr.rel (0) target = $region13
    $region12: #{tpu_custom_call.1} parent=1 // pred_region
      _
    $region13: #{tpu_custom_call.1} parent=1 // pred_fallthru
      _
    // Predicated region
    $region14: #{tpu_custom_call.1} parent=1 // pred_check
      _
    $region15: #{tpu_custom_call.1} parent=1 // pred_check_branch
      %38 = sbr.rel (0) target = $region17
    $region16: #{tpu_custom_call.1} parent=1 // pred_region
      %39 = dma.done [#allocation3], 4096
    $region17: #{tpu_custom_call.1} parent=1 // pred_fallthru
      _
    // Predicated region
    $region18: #{tpu_custom_call.1} parent=1 // pred_check
      _
    $region19: #{tpu_custom_call.1} parent=1 // pred_check_branch
      %41 = sbr.rel (0) target = $region21
    $region20: #{tpu_custom_call.1} parent=1 // pred_region
      %42 = dma.done [#allocation6], 4096
    $region21: #{tpu_custom_call.1} parent=1 // pred_fallthru
      _
    %v43 = vld [vmem:[#allocation2] sm:$0xff]
    %v44 = vld [vmem:[#allocation2 + $0x10] sm:$0xff]
    %v45 = vld [vmem:[#allocation2 + $0x20] sm:$0xff]
    %v46 = vld [vmem:[#allocation2 + $0x30] sm:$0xff]
    %v47 = vld [vmem:[#allocation2 + $0x40] sm:$0xff]
    %v48 = vld [vmem:[#allocation2 + $0x50] sm:$0xff]
    %v49 = vld [vmem:[#allocation2 + $0x60] sm:$0xff]
    %v50 = vld [vmem:[#allocation2 + $0x70] sm:$0xff]
    %v51 = vld [vmem:[#allocation2 + $0x80] sm:$0xff]
    %v52 = vld [vmem:[#allocation2 + $0x90] sm:$0xff]
    %v53 = vld [vmem:[#allocation2 + $0xa0] sm:$0xff]
    %v54 = vld [vmem:[#allocation2 + $0xb0] sm:$0xff]
    %v55 = vld [vmem:[#allocation2 + $0xc0] sm:$0xff]
    %v56 = vld [vmem:[#allocation2 + $0xd0] sm:$0xff]
    %v57 = vld [vmem:[#allocation2 + $0xe0] sm:$0xff]
    %v58 = vld [vmem:[#allocation2 + $0xf0] sm:$0xff]
    %s59 = scalar_lea.vmem [#allocation2], 8
    %v60 = vld [vmem:[%s59] sm:$0xff]
    %v61 = vld [vmem:[%s59 + $0x10] sm:$0xff]
    %v62 = vld [vmem:[%s59 + $0x20] sm:$0xff]
    %v63 = vld [vmem:[%s59 + $0x30] sm:$0xff]
    %v64 = vld [vmem:[%s59 + $0x40] sm:$0xff]
    %v65 = vld [vmem:[%s59 + $0x50] sm:$0xff]
    %v66 = vld [vmem:[%s59 + $0x60] sm:$0xff]
    %v67 = vld [vmem:[%s59 + $0x70] sm:$0xff]
    %v68 = vld [vmem:[%s59 + $0x80] sm:$0xff]
    %v69 = vld [vmem:[%s59 + $0x90] sm:$0xff]
    %v70 = vld [vmem:[%s59 + $0xa0] sm:$0xff]
    %v71 = vld [vmem:[%s59 + $0xb0] sm:$0xff]
    %v72 = vld [vmem:[%s59 + $0xc0] sm:$0xff]
    %v73 = vld [vmem:[%s59 + $0xd0] sm:$0xff]
    %v74 = vld [vmem:[%s59 + $0xe0] sm:$0xff]
    %v75 = vld [vmem:[%s59 + $0xf0] sm:$0xff]
    %76 = vadd.xlane.f32.xlu0 %v43
    %v77 = vpop.xlane.xlu0 %76
    %78 = vadd.xlane.f32.xlu0 %v44
    %v79 = vpop.xlane.xlu0 %78
    %80 = vadd.xlane.f32.xlu0 %v45
    %v81 = vpop.xlane.xlu0 %80
    %82 = vadd.xlane.f32.xlu0 %v46
    %v83 = vpop.xlane.xlu0 %82
    %84 = vadd.xlane.f32.xlu0 %v47
    %v85 = vpop.xlane.xlu0 %84
    %86 = vadd.xlane.f32.xlu0 %v48
    %v87 = vpop.xlane.xlu0 %86
    %88 = vadd.xlane.f32.xlu0 %v49
    %v89 = vpop.xlane.xlu0 %88
    %90 = vadd.xlane.f32.xlu0 %v50
    %v91 = vpop.xlane.xlu0 %90
    %92 = vadd.xlane.f32.xlu0 %v51
    %v93 = vpop.xlane.xlu0 %92
    %94 = vadd.xlane.f32.xlu0 %v52
    %v95 = vpop.xlane.xlu0 %94
    %96 = vadd.xlane.f32.xlu0 %v53
    %v97 = vpop.xlane.xlu0 %96
    %98 = vadd.xlane.f32.xlu0 %v54
    %v99 = vpop.xlane.xlu0 %98
    %100 = vadd.xlane.f32.xlu0 %v55
    %v101 = vpop.xlane.xlu0 %100
    %102 = vadd.xlane.f32.xlu0 %v56
    %v103 = vpop.xlane.xlu0 %102
    %104 = vadd.xlane.f32.xlu0 %v57
    %v105 = vpop.xlane.xlu0 %104
    %106 = vadd.xlane.f32.xlu0 %v58
    %v107 = vpop.xlane.xlu0 %106
    %108 = vadd.xlane.f32.xlu0 %v60
    %v109 = vpop.xlane.xlu0 %108
    %110 = vadd.xlane.f32.xlu0 %v61
    %v111 = vpop.xlane.xlu0 %110
    %112 = vadd.xlane.f32.xlu0 %v62
    %v113 = vpop.xlane.xlu0 %112
    %114 = vadd.xlane.f32.xlu0 %v63
    %v115 = vpop.xlane.xlu0 %114
    %116 = vadd.xlane.f32.xlu0 %v64
    %v117 = vpop.xlane.xlu0 %116
    %118 = vadd.xlane.f32.xlu0 %v65
    %v119 = vpop.xlane.xlu0 %118
    %120 = vadd.xlane.f32.xlu0 %v66
    %v121 = vpop.xlane.xlu0 %120
    %122 = vadd.xlane.f32.xlu0 %v67
    %v123 = vpop.xlane.xlu0 %122
    %124 = vadd.xlane.f32.xlu0 %v68
    %v125 = vpop.xlane.xlu0 %124
    %126 = vadd.xlane.f32.xlu0 %v69
    %v127 = vpop.xlane.xlu0 %126
    %128 = vadd.xlane.f32.xlu0 %v70
    %v129 = vpop.xlane.xlu0 %128
    %130 = vadd.xlane.f32.xlu0 %v71
    %v131 = vpop.xlane.xlu0 %130
    %132 = vadd.xlane.f32.xlu0 %v72
    %v133 = vpop.xlane.xlu0 %132
    %134 = vadd.xlane.f32.xlu0 %v73
    %v135 = vpop.xlane.xlu0 %134
    %136 = vadd.xlane.f32.xlu0 %v74
    %v137 = vpop.xlane.xlu0 %136
    %138 = vadd.xlane.f32.xlu0 %v75
    %v139 = vpop.xlane.xlu0 %138
    %v140 = vadd.f32 %v77, %v109
    %v141 = vadd.f32 %v79, %v111
    %v142 = vadd.f32 %v81, %v113
    %v143 = vadd.f32 %v83, %v115
    %v144 = vadd.f32 %v85, %v117
    %v145 = vadd.f32 %v87, %v119
    %v146 = vadd.f32 %v89, %v121
    %v147 = vadd.f32 %v91, %v123
    %v148 = vadd.f32 %v93, %v125
    %v149 = vadd.f32 %v95, %v127
    %v150 = vadd.f32 %v97, %v129
    %v151 = vadd.f32 %v99, %v131
    %v152 = vadd.f32 %v101, %v133
    %v153 = vadd.f32 %v103, %v135
    %v154 = vadd.f32 %v105, %v137
    %v155 = vadd.f32 %v107, %v139
    %v156 = vmul.f32 %v140, 0.00390625
    %v157 = vmul.f32 %v141, 0.00390625
    %v158 = vmul.f32 %v142, 0.00390625
    %v159 = vmul.f32 %v143, 0.00390625
    %v160 = vmul.f32 %v144, 0.00390625
    %v161 = vmul.f32 %v145, 0.00390625
    %v162 = vmul.f32 %v146, 0.00390625
    %v163 = vmul.f32 %v147, 0.00390625
    %v164 = vmul.f32 %v148, 0.00390625
    %v165 = vmul.f32 %v149, 0.00390625
    %v166 = vmul.f32 %v150, 0.00390625
    %v167 = vmul.f32 %v151, 0.00390625
    %v168 = vmul.f32 %v152, 0.00390625
    %v169 = vmul.f32 %v153, 0.00390625
    %v170 = vmul.f32 %v154, 0.00390625
    %v171 = vmul.f32 %v155, 0.00390625
    %v172 = vsub.f32 %v43, %v156
    %v173 = vsub.f32 %v44, %v157
    %v174 = vsub.f32 %v45, %v158
    %v175 = vsub.f32 %v46, %v159
    %v176 = vsub.f32 %v47, %v160
    %v177 = vsub.f32 %v48, %v161
    %v178 = vsub.f32 %v49, %v162
    %v179 = vsub.f32 %v50, %v163
    %v180 = vsub.f32 %v51, %v164
    %v181 = vsub.f32 %v52, %v165
    %v182 = vsub.f32 %v53, %v166
    %v183 = vsub.f32 %v54, %v167
    %v184 = vsub.f32 %v55, %v168
    %v185 = vsub.f32 %v56, %v169
    %v186 = vsub.f32 %v57, %v170
    %v187 = vsub.f32 %v58, %v171
    %v188 = vsub.f32 %v60, %v156
    %v189 = vsub.f32 %v61, %v157
    %v190 = vsub.f32 %v62, %v158
    %v191 = vsub.f32 %v63, %v159
    %v192 = vsub.f32 %v64, %v160
    %v193 = vsub.f32 %v65, %v161
    %v194 = vsub.f32 %v66, %v162
    %v195 = vsub.f32 %v67, %v163
    %v196 = vsub.f32 %v68, %v164
    %v197 = vsub.f32 %v69, %v165
    %v198 = vsub.f32 %v70, %v166
    %v199 = vsub.f32 %v71, %v167
    %v200 = vsub.f32 %v72, %v168
    %v201 = vsub.f32 %v73, %v169
    %v202 = vsub.f32 %v74, %v170
    %v203 = vsub.f32 %v75, %v171
    %v204 = vmul.f32 %v172, %v172
    %v205 = vmul.f32 %v173, %v173
    %v206 = vmul.f32 %v174, %v174
    %v207 = vmul.f32 %v175, %v175
    %v208 = vmul.f32 %v176, %v176
    %v209 = vmul.f32 %v177, %v177
    %v210 = vmul.f32 %v178, %v178
    %v211 = vmul.f32 %v179, %v179
    %v212 = vmul.f32 %v180, %v180
    %v213 = vmul.f32 %v181, %v181
    %v214 = vmul.f32 %v182, %v182
    %v215 = vmul.f32 %v183, %v183
    %v216 = vmul.f32 %v184, %v184
    %v217 = vmul.f32 %v185, %v185
    %v218 = vmul.f32 %v186, %v186
    %v219 = vmul.f32 %v187, %v187
    %220 = vadd.xlane.f32.xlu0 %v204
    %v221 = vpop.xlane.xlu0 %220
    %222 = vadd.xlane.f32.xlu0 %v205
    %v223 = vpop.xlane.xlu0 %222
    %224 = vadd.xlane.f32.xlu0 %v206
    %v225 = vpop.xlane.xlu0 %224
    %226 = vadd.xlane.f32.xlu0 %v207
    %v227 = vpop.xlane.xlu0 %226
    %228 = vadd.xlane.f32.xlu0 %v208
    %v229 = vpop.xlane.xlu0 %228
    %230 = vadd.xlane.f32.xlu0 %v209
    %v231 = vpop.xlane.xlu0 %230
    %232 = vadd.xlane.f32.xlu0 %v210
    %v233 = vpop.xlane.xlu0 %232
    %234 = vadd.xlane.f32.xlu0 %v211
    %v235 = vpop.xlane.xlu0 %234
    %236 = vadd.xlane.f32.xlu0 %v212
    %v237 = vpop.xlane.xlu0 %236
    %238 = vadd.xlane.f32.xlu0 %v213
    %v239 = vpop.xlane.xlu0 %238
    %240 = vadd.xlane.f32.xlu0 %v214
    %v241 = vpop.xlane.xlu0 %240
    %242 = vadd.xlane.f32.xlu0 %v215
    %v243 = vpop.xlane.xlu0 %242
    %244 = vadd.xlane.f32.xlu0 %v216
    %v245 = vpop.xlane.xlu0 %244
    %246 = vadd.xlane.f32.xlu0 %v217
    %v247 = vpop.xlane.xlu0 %246
    %248 = vadd.xlane.f32.xlu0 %v218
    %v249 = vpop.xlane.xlu0 %248
    %250 = vadd.xlane.f32.xlu0 %v219
    %v251 = vpop.xlane.xlu0 %250
    %v252 = vmul.f32 %v188, %v188
    %v253 = vmul.f32 %v189, %v189
    %v254 = vmul.f32 %v190, %v190
    %v255 = vmul.f32 %v191, %v191
    %v256 = vmul.f32 %v192, %v192
    %v257 = vmul.f32 %v193, %v193
    %v258 = vmul.f32 %v194, %v194
    %v259 = vmul.f32 %v195, %v195
    %v260 = vmul.f32 %v196, %v196
    %v261 = vmul.f32 %v197, %v197
    %v262 = vmul.f32 %v198, %v198
    %v263 = vmul.f32 %v199, %v199
    %v264 = vmul.f32 %v200, %v200
    %v265 = vmul.f32 %v201, %v201
    %v266 = vmul.f32 %v202, %v202
    %v267 = vmul.f32 %v203, %v203
    %268 = vadd.xlane.f32.xlu0 %v252
    %v269 = vpop.xlane.xlu0 %268
    %270 = vadd.xlane.f32.xlu0 %v253
    %v271 = vpop.xlane.xlu0 %270
    %272 = vadd.xlane.f32.xlu0 %v254
    %v273 = vpop.xlane.xlu0 %272
    %274 = vadd.xlane.f32.xlu0 %v255
    %v275 = vpop.xlane.xlu0 %274
    %276 = vadd.xlane.f32.xlu0 %v256
    %v277 = vpop.xlane.xlu0 %276
    %278 = vadd.xlane.f32.xlu0 %v257
    %v279 = vpop.xlane.xlu0 %278
    %280 = vadd.xlane.f32.xlu0 %v258
    %v281 = vpop.xlane.xlu0 %280
    %282 = vadd.xlane.f32.xlu0 %v259
    %v283 = vpop.xlane.xlu0 %282
    %284 = vadd.xlane.f32.xlu0 %v260
    %v285 = vpop.xlane.xlu0 %284
    %286 = vadd.xlane.f32.xlu0 %v261
    %v287 = vpop.xlane.xlu0 %286
    %288 = vadd.xlane.f32.xlu0 %v262
    %v289 = vpop.xlane.xlu0 %288
    %290 = vadd.xlane.f32.xlu0 %v263
    %v291 = vpop.xlane.xlu0 %290
    %292 = vadd.xlane.f32.xlu0 %v264
    %v293 = vpop.xlane.xlu0 %292
    %294 = vadd.xlane.f32.xlu0 %v265
    %v295 = vpop.xlane.xlu0 %294
    %296 = vadd.xlane.f32.xlu0 %v266
    %v297 = vpop.xlane.xlu0 %296
    %298 = vadd.xlane.f32.xlu0 %v267
    %v299 = vpop.xlane.xlu0 %298
    %v300 = vadd.f32 %v221, %v269
    %v301 = vadd.f32 %v223, %v271
    %v302 = vadd.f32 %v225, %v273
    %v303 = vadd.f32 %v227, %v275
    %v304 = vadd.f32 %v229, %v277
    %v305 = vadd.f32 %v231, %v279
    %v306 = vadd.f32 %v233, %v281
    %v307 = vadd.f32 %v235, %v283
    %v308 = vadd.f32 %v237, %v285
    %v309 = vadd.f32 %v239, %v287
    %v310 = vadd.f32 %v241, %v289
    %v311 = vadd.f32 %v243, %v291
    %v312 = vadd.f32 %v245, %v293
    %v313 = vadd.f32 %v247, %v295
    %v314 = vadd.f32 %v249, %v297
    %v315 = vadd.f32 %v251, %v299
    %v316 = vmul.f32 %v300, 0.00390625
    %v317 = vmul.f32 %v301, 0.00390625
    %v318 = vmul.f32 %v302, 0.00390625
    %v319 = vmul.f32 %v303, 0.00390625
    %v320 = vmul.f32 %v304, 0.00390625
    %v321 = vmul.f32 %v305, 0.00390625
    %v322 = vmul.f32 %v306, 0.00390625
    %v323 = vmul.f32 %v307, 0.00390625
    %v324 = vmul.f32 %v308, 0.00390625
    %v325 = vmul.f32 %v309, 0.00390625
    %v326 = vmul.f32 %v310, 0.00390625
    %v327 = vmul.f32 %v311, 0.00390625
    %v328 = vmul.f32 %v312, 0.00390625
    %v329 = vmul.f32 %v313, 0.00390625
    %v330 = vmul.f32 %v314, 0.00390625
    %v331 = vmul.f32 %v315, 0.00390625
    %v332 = vadd.f32 %v316, 1e-05
    %v333 = vadd.f32 %v317, 1e-05
    %v334 = vadd.f32 %v318, 1e-05
    %v335 = vadd.f32 %v319, 1e-05
    %v336 = vadd.f32 %v320, 1e-05
    %v337 = vadd.f32 %v321, 1e-05
    %v338 = vadd.f32 %v322, 1e-05
    %v339 = vadd.f32 %v323, 1e-05
    %v340 = vadd.f32 %v324, 1e-05
    %v341 = vadd.f32 %v325, 1e-05
    %v342 = vadd.f32 %v326, 1e-05
    %v343 = vadd.f32 %v327, 1e-05
    %v344 = vadd.f32 %v328, 1e-05
    %v345 = vadd.f32 %v329, 1e-05
    %v346 = vadd.f32 %v330, 1e-05
    %v347 = vadd.f32 %v331, 1e-05
    %v348 = vrsqrt.pop %v332
    %v349 = vrsqrt.pop %v333
    %v350 = vrsqrt.pop %v334
    %v351 = vrsqrt.pop %v335
    %v352 = vrsqrt.pop %v336
    %v353 = vrsqrt.pop %v337
    %v354 = vrsqrt.pop %v338
    %v355 = vrsqrt.pop %v339
    %v356 = vrsqrt.pop %v340
    %v357 = vrsqrt.pop %v341
    %v358 = vrsqrt.pop %v342
    %v359 = vrsqrt.pop %v343
    %v360 = vrsqrt.pop %v344
    %v361 = vrsqrt.pop %v345
    %v362 = vrsqrt.pop %v346
    %v363 = vrsqrt.pop %v347
    %v364 = vmul.f32 %v172, %v348
    %v365 = vmul.f32 %v188, %v348
    %v366 = vmul.f32 %v173, %v349
    %v367 = vmul.f32 %v189, %v349
    %v368 = vmul.f32 %v174, %v350
    %v369 = vmul.f32 %v190, %v350
    %v370 = vmul.f32 %v175, %v351
    %v371 = vmul.f32 %v191, %v351
    %v372 = vmul.f32 %v176, %v352
    %v373 = vmul.f32 %v192, %v352
    %v374 = vmul.f32 %v177, %v353
    %v375 = vmul.f32 %v193, %v353
    %v376 = vmul.f32 %v178, %v354
    %v377 = vmul.f32 %v194, %v354
    %v378 = vmul.f32 %v179, %v355
    %v379 = vmul.f32 %v195, %v355
    %v380 = vmul.f32 %v180, %v356
    %v381 = vmul.f32 %v196, %v356
    %v382 = vmul.f32 %v181, %v357
    %v383 = vmul.f32 %v197, %v357
    %v384 = vmul.f32 %v182, %v358
    %v385 = vmul.f32 %v198, %v358
    %v386 = vmul.f32 %v183, %v359
    %v387 = vmul.f32 %v199, %v359
    %v388 = vmul.f32 %v184, %v360
    %v389 = vmul.f32 %v200, %v360
    %v390 = vmul.f32 %v185, %v361
    %v391 = vmul.f32 %v201, %v361
    %v392 = vmul.f32 %v186, %v362
    %v393 = vmul.f32 %v202, %v362
    %v394 = vmul.f32 %v187, %v363
    %v395 = vmul.f32 %v203, %v363
    %v396 = vpack.c.bf16 %v366, %v364
    %v397 = vpack.c.bf16 %v367, %v365
    %v398 = vpack.c.bf16 %v370, %v368
    %v399 = vpack.c.bf16 %v371, %v369
    %v400 = vpack.c.bf16 %v374, %v372
    %v401 = vpack.c.bf16 %v375, %v373
    %v402 = vpack.c.bf16 %v378, %v376
    %v403 = vpack.c.bf16 %v379, %v377
    %v404 = vpack.c.bf16 %v382, %v380
    %v405 = vpack.c.bf16 %v383, %v381
    %v406 = vpack.c.bf16 %v386, %v384
    %v407 = vpack.c.bf16 %v387, %v385
    %v408 = vpack.c.bf16 %v390, %v388
    %v409 = vpack.c.bf16 %v391, %v389
    %v410 = vpack.c.bf16 %v394, %v392
    %v411 = vpack.c.bf16 %v395, %v393
    %v412 = vld [vmem:[#allocation5] sm:$0xff]
    %v413 = vld [vmem:[#allocation5 + $0x8] sm:$0xff]
    %v414 = vld [vmem:[#allocation5 + $0x10] sm:$0xff]
    %v415 = vld [vmem:[#allocation5 + $0x18] sm:$0xff]
    %v416 = vld [vmem:[#allocation5 + $0x20] sm:$0xff]
    %v417 = vld [vmem:[#allocation5 + $0x28] sm:$0xff]
    %v418 = vld [vmem:[#allocation5 + $0x30] sm:$0xff]
    %v419 = vld [vmem:[#allocation5 + $0x38] sm:$0xff]
    %v420 = vld [vmem:[#allocation5 + $0x40] sm:$0xff]
    %v421 = vld [vmem:[#allocation5 + $0x48] sm:$0xff]
    %v422 = vld [vmem:[#allocation5 + $0x50] sm:$0xff]
    %v423 = vld [vmem:[#allocation5 + $0x58] sm:$0xff]
    %v424 = vld [vmem:[#allocation5 + $0x60] sm:$0xff]
    %v425 = vld [vmem:[#allocation5 + $0x68] sm:$0xff]
    %v426 = vld [vmem:[#allocation5 + $0x70] sm:$0xff]
    %v427 = vld [vmem:[#allocation5 + $0x78] sm:$0xff]
    %v428 = vld [vmem:[#allocation5 + $0x80] sm:$0xff]
    %v429 = vld [vmem:[#allocation5 + $0x88] sm:$0xff]
    %v430 = vld [vmem:[#allocation5 + $0x90] sm:$0xff]
    %v431 = vld [vmem:[#allocation5 + $0x98] sm:$0xff]
    %v432 = vld [vmem:[#allocation5 + $0xa0] sm:$0xff]
    %v433 = vld [vmem:[#allocation5 + $0xa8] sm:$0xff]
    %v434 = vld [vmem:[#allocation5 + $0xb0] sm:$0xff]
    %v435 = vld [vmem:[#allocation5 + $0xb8] sm:$0xff]
    %v436 = vld [vmem:[#allocation5 + $0xc0] sm:$0xff]
    %v437 = vld [vmem:[#allocation5 + $0xc8] sm:$0xff]
    %v438 = vld [vmem:[#allocation5 + $0xd0] sm:$0xff]
    %v439 = vld [vmem:[#allocation5 + $0xd8] sm:$0xff]
    %v440 = vld [vmem:[#allocation5 + $0xe0] sm:$0xff]
    %v441 = vld [vmem:[#allocation5 + $0xe8] sm:$0xff]
    %v442 = vld [vmem:[#allocation5 + $0xf0] sm:$0xff]
    %v443 = vld [vmem:[#allocation5 + $0xf8] sm:$0xff]
    %v444 = vld [vmem:[%s2] sm:$0x3]
    %v446 = vlaneseq
    %v447 = vshrl.u32 %v446, 7
    %v448 = vsub.s32 0, %v447
    %v449 = vrot.slane %v444, %v448
    %v450 = vlaneseq
    %v451 = vshrl.u32 %v450, 7
    %v452 = vsub.s32 1, %v451
    %v453 = vrot.slane %v444, %v452
    %v488 = vunpack.c.l.b16 %v412
    %v489 = vunpack.c.h.b16 %v412
    %v490 = vunpack.c.l.b16 %v413
    %v491 = vunpack.c.h.b16 %v413
    %v492 = vunpack.c.l.b16 %v414
    %v493 = vunpack.c.h.b16 %v414
    %v494 = vunpack.c.l.b16 %v415
    %v495 = vunpack.c.h.b16 %v415
    %v496 = vunpack.c.l.b16 %v416
    %v497 = vunpack.c.h.b16 %v416
    %v498 = vunpack.c.l.b16 %v417
    %v499 = vunpack.c.h.b16 %v417
    %v500 = vunpack.c.l.b16 %v418
    %v501 = vunpack.c.h.b16 %v418
    %v502 = vunpack.c.l.b16 %v419
    %v503 = vunpack.c.h.b16 %v419
    %v504 = vunpack.c.l.b16 %v420
    %v505 = vunpack.c.h.b16 %v420
    %v506 = vunpack.c.l.b16 %v421
    %v507 = vunpack.c.h.b16 %v421
    %v508 = vunpack.c.l.b16 %v422
    %v509 = vunpack.c.h.b16 %v422
    %v510 = vunpack.c.l.b16 %v423
    %v511 = vunpack.c.h.b16 %v423
    %v512 = vunpack.c.l.b16 %v424
    %v513 = vunpack.c.h.b16 %v424
    %v514 = vunpack.c.l.b16 %v425
    %v515 = vunpack.c.h.b16 %v425
    %v516 = vunpack.c.l.b16 %v426
    %v517 = vunpack.c.h.b16 %v426
    %v518 = vunpack.c.l.b16 %v427
    %v519 = vunpack.c.h.b16 %v427
    %v520 = vunpack.c.l.b16 %v428
    %v521 = vunpack.c.h.b16 %v428
    %v522 = vunpack.c.l.b16 %v429
    %v523 = vunpack.c.h.b16 %v429
    %v524 = vunpack.c.l.b16 %v430
    %v525 = vunpack.c.h.b16 %v430
    %v526 = vunpack.c.l.b16 %v431
    %v527 = vunpack.c.h.b16 %v431
    %v528 = vunpack.c.l.b16 %v432
    %v529 = vunpack.c.h.b16 %v432
    %v530 = vunpack.c.l.b16 %v433
    %v531 = vunpack.c.h.b16 %v433
    %v532 = vunpack.c.l.b16 %v434
    %v533 = vunpack.c.h.b16 %v434
    %v534 = vunpack.c.l.b16 %v435
    %v535 = vunpack.c.h.b16 %v435
    %v536 = vunpack.c.l.b16 %v436
    %v537 = vunpack.c.h.b16 %v436
    %v538 = vunpack.c.l.b16 %v437
    %v539 = vunpack.c.h.b16 %v437
    %v540 = vunpack.c.l.b16 %v438
    %v541 = vunpack.c.h.b16 %v438
    %v542 = vunpack.c.l.b16 %v439
    %v543 = vunpack.c.h.b16 %v439
    %v544 = vunpack.c.l.b16 %v440
    %v545 = vunpack.c.h.b16 %v440
    %v546 = vunpack.c.l.b16 %v441
    %v547 = vunpack.c.h.b16 %v441
    %v548 = vunpack.c.l.b16 %v442
    %v549 = vunpack.c.h.b16 %v442
    %v550 = vunpack.c.l.b16 %v443
    %v551 = vunpack.c.h.b16 %v443
    %v552 = vpack.c.b16 %v490, %v488
    %v553 = vpack.c.b16 %v491, %v489
    %v554 = vpack.c.b16 %v494, %v492
    %v555 = vpack.c.b16 %v495, %v493
    %v556 = vpack.c.b16 %v498, %v496
    %v557 = vpack.c.b16 %v499, %v497
    %v558 = vpack.c.b16 %v502, %v500
    %v559 = vpack.c.b16 %v503, %v501
    %v560 = vpack.c.b16 %v506, %v504
    %v561 = vpack.c.b16 %v507, %v505
    %v562 = vpack.c.b16 %v510, %v508
    %v563 = vpack.c.b16 %v511, %v509
    %v564 = vpack.c.b16 %v514, %v512
    %v565 = vpack.c.b16 %v515, %v513
    %v566 = vpack.c.b16 %v518, %v516
    %v567 = vpack.c.b16 %v519, %v517
    %v568 = vpack.c.b16 %v522, %v520
    %v569 = vpack.c.b16 %v523, %v521
    %v570 = vpack.c.b16 %v526, %v524
    %v571 = vpack.c.b16 %v527, %v525
    %v572 = vpack.c.b16 %v530, %v528
    %v573 = vpack.c.b16 %v531, %v529
    %v574 = vpack.c.b16 %v534, %v532
    %v575 = vpack.c.b16 %v535, %v533
    %v576 = vpack.c.b16 %v538, %v536
    %v577 = vpack.c.b16 %v539, %v537
    %v578 = vpack.c.b16 %v542, %v540
    %v579 = vpack.c.b16 %v543, %v541
    %v580 = vpack.c.b16 %v546, %v544
    %v581 = vpack.c.b16 %v547, %v545
    %v582 = vpack.c.b16 %v550, %v548
    %v583 = vpack.c.b16 %v551, %v549
    %616 = vmatprep.subr.bf16.mxu0 %v553
    %617 = vmatpush1.bf16.msra.mxu0 %v552
    %618 = vmatprep.subr.bf16.mxu0 %v555
    %619 = vmatpush1.bf16.msra.mxu0 %v554
    %620 = vmatprep.subr.bf16.mxu0 %v557
    %621 = vmatpush1.bf16.msra.mxu0 %v556
    %622 = vmatprep.subr.bf16.mxu0 %v559
    %623 = vmatpush1.bf16.msra.mxu0 %v558
    %624 = vmatprep.subr.bf16.mxu0 %v561
    %625 = vmatpush1.bf16.msra.mxu0 %v560
    %626 = vmatprep.subr.bf16.mxu0 %v563
    %627 = vmatpush1.bf16.msra.mxu0 %v562
    %628 = vmatprep.subr.bf16.mxu0 %v565
    %629 = vmatpush1.bf16.msra.mxu0 %v564
    %630 = vmatprep.subr.bf16.mxu0 %v567
    %631 = vmatpush1.bf16.msra.mxu0 %v566
    %632 = vmatprep.subr.bf16.mxu0 %v569
    %633 = vmatpush1.bf16.msra.mxu0 %v568
    %634 = vmatprep.subr.bf16.mxu0 %v571
    %635 = vmatpush1.bf16.msra.mxu0 %v570
    %636 = vmatprep.subr.bf16.mxu0 %v573
    %637 = vmatpush1.bf16.msra.mxu0 %v572
    %638 = vmatprep.subr.bf16.mxu0 %v575
    %639 = vmatpush1.bf16.msra.mxu0 %v574
    %640 = vmatprep.subr.bf16.mxu0 %v577
    %641 = vmatpush1.bf16.msra.mxu0 %v576
    %642 = vmatprep.subr.bf16.mxu0 %v579
    %643 = vmatpush1.bf16.msra.mxu0 %v578
    %644 = vmatprep.subr.bf16.mxu0 %v581
    %645 = vmatpush1.bf16.msra.mxu0 %v580
    %646 = vmatprep.subr.bf16.mxu0 %v583
    %647 = vmatpush1.bf16.msra.mxu0 %v582
    %648 = vmatprep.mubr.bf16.mxu0 %v397
    %649 = vmatmul.mubr.bf16.gmra.mrb[0].mxu0 %v396
    %v650 = vpop.f32.mrb[0].mxu0
    %v651 = vadd.f32 %v449, %v650
    %v652 = vpop.f32.mrb[0].mxu0
    %v653 = vadd.f32 %v453, %v652
    %v654 = vpop.f32.mrb[0].mxu0
    %v655 = vadd.f32 %v449, %v654
    %v656 = vpop.f32.mrb[0].mxu0
    %v657 = vadd.f32 %v453, %v656
    %658 = vmatprep.mubr.bf16.mxu0 %v399
    %659 = vmatmul.mubr.bf16.gmra.mrb[0].mxu0 %v398
    %v660 = vpop.f32.mrb[0].mxu0
    %v661 = vadd.f32 %v449, %v660
    %v662 = vpop.f32.mrb[0].mxu0
    %v663 = vadd.f32 %v453, %v662
    %v664 = vpop.f32.mrb[0].mxu0
    %v665 = vadd.f32 %v449, %v664
    %v666 = vpop.f32.mrb[0].mxu0
    %v667 = vadd.f32 %v453, %v666
    %668 = vmatprep.mubr.bf16.mxu0 %v401
    %669 = vmatmul.mubr.bf16.gmra.mrb[0].mxu0 %v400
    %v670 = vpop.f32.mrb[0].mxu0
    %v671 = vadd.f32 %v449, %v670
    %v672 = vpop.f32.mrb[0].mxu0
    %v673 = vadd.f32 %v453, %v672
    %v674 = vpop.f32.mrb[0].mxu0
    %v675 = vadd.f32 %v449, %v674
    %v676 = vpop.f32.mrb[0].mxu0
    %v677 = vadd.f32 %v453, %v676
    %678 = vmatprep.mubr.bf16.mxu0 %v403
    %679 = vmatmul.mubr.bf16.gmra.mrb[0].mxu0 %v402
    %v680 = vpop.f32.mrb[0].mxu0
    %v681 = vadd.f32 %v449, %v680
    %v682 = vpop.f32.mrb[0].mxu0
    %v683 = vadd.f32 %v453, %v682
    %v684 = vpop.f32.mrb[0].mxu0
    %v685 = vadd.f32 %v449, %v684
    %v686 = vpop.f32.mrb[0].mxu0
    %v687 = vadd.f32 %v453, %v686
    %688 = vmatprep.mubr.bf16.mxu0 %v405
    %689 = vmatmul.mubr.bf16.gmra.mrb[0].mxu0 %v404
    %v690 = vpop.f32.mrb[0].mxu0
    %v691 = vadd.f32 %v449, %v690
    %v692 = vpop.f32.mrb[0].mxu0
    %v693 = vadd.f32 %v453, %v692
    %v694 = vpop.f32.mrb[0].mxu0
    %v695 = vadd.f32 %v449, %v694
    %v696 = vpop.f32.mrb[0].mxu0
    %v697 = vadd.f32 %v453, %v696
    %698 = vmatprep.mubr.bf16.mxu0 %v407
    %699 = vmatmul.mubr.bf16.gmra.mrb[0].mxu0 %v406
    %v700 = vpop.f32.mrb[0].mxu0
    %v701 = vadd.f32 %v449, %v700
    %v702 = vpop.f32.mrb[0].mxu0
    %v703 = vadd.f32 %v453, %v702
    %v704 = vpop.f32.mrb[0].mxu0
    %v705 = vadd.f32 %v449, %v704
    %v706 = vpop.f32.mrb[0].mxu0
    %v707 = vadd.f32 %v453, %v706
    %708 = vmatprep.mubr.bf16.mxu0 %v409
    %709 = vmatmul.mubr.bf16.gmra.mrb[0].mxu0 %v408
    %v710 = vpop.f32.mrb[0].mxu0
    %v711 = vadd.f32 %v449, %v710
    %v712 = vpop.f32.mrb[0].mxu0
    %v713 = vadd.f32 %v453, %v712
    %v714 = vpop.f32.mrb[0].mxu0
    %v715 = vadd.f32 %v449, %v714
    %v716 = vpop.f32.mrb[0].mxu0
    %v717 = vadd.f32 %v453, %v716
    %718 = vmatprep.mubr.bf16.mxu0 %v411
    %719 = vmatmul.mubr.bf16.gmra.mrb[0].mxu0 %v410
    %v720 = vpop.f32.mrb[0].mxu0
    %v721 = vadd.f32 %v449, %v720
    %v722 = vpop.f32.mrb[0].mxu0
    %v723 = vadd.f32 %v453, %v722
    %v724 = vpop.f32.mrb[0].mxu0
    %v725 = vadd.f32 %v449, %v724
    %v726 = vpop.f32.mrb[0].mxu0
    %v727 = vadd.f32 %v453, %v726
    %728 = vdwg.mxu0
    %729 = vst [vmem:[#allocation7] sm:$0xff] %v651
    %730 = vst [vmem:[#allocation7 + $0x8] sm:$0xff] %v653
    %731 = vst [vmem:[#allocation7 + $0x10] sm:$0xff] %v655
    %732 = vst [vmem:[#allocation7 + $0x18] sm:$0xff] %v657
    %733 = vst [vmem:[#allocation7 + $0x20] sm:$0xff] %v661
    %734 = vst [vmem:[#allocation7 + $0x28] sm:$0xff] %v663
    %735 = vst [vmem:[#allocation7 + $0x30] sm:$0xff] %v665
    %736 = vst [vmem:[#allocation7 + $0x38] sm:$0xff] %v667
    %737 = vst [vmem:[#allocation7 + $0x40] sm:$0xff] %v671
    %738 = vst [vmem:[#allocation7 + $0x48] sm:$0xff] %v673
    %739 = vst [vmem:[#allocation7 + $0x50] sm:$0xff] %v675
    %740 = vst [vmem:[#allocation7 + $0x58] sm:$0xff] %v677
    %741 = vst [vmem:[#allocation7 + $0x60] sm:$0xff] %v681
    %742 = vst [vmem:[#allocation7 + $0x68] sm:$0xff] %v683
    %743 = vst [vmem:[#allocation7 + $0x70] sm:$0xff] %v685
    %744 = vst [vmem:[#allocation7 + $0x78] sm:$0xff] %v687
    %745 = vst [vmem:[#allocation7 + $0x80] sm:$0xff] %v691
    %746 = vst [vmem:[#allocation7 + $0x88] sm:$0xff] %v693
    %747 = vst [vmem:[#allocation7 + $0x90] sm:$0xff] %v695
    %748 = vst [vmem:[#allocation7 + $0x98] sm:$0xff] %v697
    %749 = vst [vmem:[#allocation7 + $0xa0] sm:$0xff] %v701
    %750 = vst [vmem:[#allocation7 + $0xa8] sm:$0xff] %v703
    %751 = vst [vmem:[#allocation7 + $0xb0] sm:$0xff] %v705
    %752 = vst [vmem:[#allocation7 + $0xb8] sm:$0xff] %v707
    %753 = vst [vmem:[#allocation7 + $0xc0] sm:$0xff] %v711
    %754 = vst [vmem:[#allocation7 + $0xc8] sm:$0xff] %v713
    %755 = vst [vmem:[#allocation7 + $0xd0] sm:$0xff] %v715
    %756 = vst [vmem:[#allocation7 + $0xd8] sm:$0xff] %v717
    %757 = vst [vmem:[#allocation7 + $0xe0] sm:$0xff] %v721
    %758 = vst [vmem:[#allocation7 + $0xe8] sm:$0xff] %v723
    %759 = vst [vmem:[#allocation7 + $0xf0] sm:$0xff] %v725
    %760 = vst [vmem:[#allocation7 + $0xf8] sm:$0xff] %v727
    // Predicated region
    $region22: #{tpu_custom_call.1} parent=1 // pred_check
      _
    $region23: #{tpu_custom_call.1} parent=1 // pred_check_branch
      %762 = sbr.rel (0) target = $region25
    $region24: #{tpu_custom_call.1} parent=1 // pred_region
      %s764 = ssub.s32 4096, 4096
      %765 = vsyncadd [#allocation4], %s764
      %s766 = sshll.u32 [#allocation7], 4
      %s767 = int_to_ptr.vmem [resolvable:$true] %s766
      %772 = dma.vmem_to_hbm [thread:$0]  %s767, 4096, %s3, [#allocation4], 256, 256, 16
    $region25: #{tpu_custom_call.1} parent=1 // pred_fallthru
      _
    // Predicated region
    $region26: #{tpu_custom_call.1} parent=1 // pred_check
      _
    $region27: #{tpu_custom_call.1} parent=1 // pred_check_branch
      %774 = sbr.rel (0) target = $region29
    $region28: #{tpu_custom_call.1} parent=1 // pred_region
      %775 = dma.done [#allocation4], 4096
    $region29: #{tpu_custom_call.1} parent=1 // pred_fallthru
      _
    %776 = vsyncpa [#allocation3], 1
    %777 = vsyncpa [#allocation6], 1
    %778 = vsyncpa [#allocation4], 1

</llo_original>
